<compile_context>
chip_gen: v7x
topology: tpu7x:2x2x1
jax: 0.10.0
libtpu: 0.0.40
codegen_flags: <defaults>
</compile_context>

<pallas_src>
import functools

import jax
import jax.numpy as jnp
import numpy as np
from jax.experimental import pallas as pl
from jax.experimental.pallas import tpu as pltpu


# --------------------------------------------------------------------------
# Pallas kernel: one (batch, spatial-tile) block of one detection level.
# Block shapes: x (C, T), w (NO, C), ia (C, 1), cst (NO, 6) -> raw/y (NO, T).
# --------------------------------------------------------------------------
def _idetect_level_kernel(stride, img_w, tile,
                          x_ref, w_ref, ia_ref, cst_ref, raw_ref, y_ref):
    # ImplicitA: per-input-channel additive implicit knowledge.  (C,T)+(C,1)
    xin = x_ref[...] + ia_ref[...]

    # 1x1 conv over channels == (NO, C) @ (C, T) on the MXU (lane-dense out).
    acc = jnp.dot(w_ref[...], xin, preferred_element_type=jnp.float32)

    cst = cst_ref[...]                      # (NO, 6) per-output-channel table
    bias = cst[:, 0:1]                      # conv bias
    imul = cst[:, 1:2]                      # ImplicitM
    mx = cst[:, 2:3]                        # rows with o == 0 (x)
    my = cst[:, 3:4]                        # rows with o == 1 (y)
    mwh = cst[:, 4:5]                       # rows with o in {2, 3}
    anc = cst[:, 5:6]                       # anchor w/h per row (0 elsewhere)

    raw = (acc + bias) * imul               # PyTorch x[i] (pre-sigmoid)
    raw_ref[...] = raw

    # Inference decode branch of IDetect.forward.
    s = jax.nn.sigmoid(raw)

    # Spatial index of every lane: col = h*W + w; recover gx=w, gy=h in-kernel.
    col = (jax.lax.broadcasted_iota(jnp.int32, (1, tile), 1)
           + pl.program_id(1) * tile)
    colf = col.astype(jnp.float32)
    gy = jnp.floor((colf + 0.5) / img_w)    # +0.5 keeps floor exact under fp div
    gx = colf - gy * img_w

    grid_term = mx * gx + my * gy           # (NO,1)x(1,T) outer-product bcast
    xy = (s * 2.0 - 0.5 + grid_term) * stride
    wh = (s * 2.0) ** 2 * anc
    mxy = mx + my
    y_ref[...] = mxy * xy + mwh * wh + (1.0 - mxy - mwh) * s


# --------------------------------------------------------------------------
# Per-level wrapper: reshape, build constant tables, call pallas_call.
# --------------------------------------------------------------------------
def idetect_level(x_nchw, w, b, ia, im, anchors_l, stride, no, na,
                  *, max_tile=512):
    B, C, H, W = x_nchw.shape
    NO = no * na
    HW = H * W

    # (B,C,H,W) -> (B,C,HW): contiguous reshape; no transpose, no channel pad.
    x3 = x_nchw.reshape(B, C, HW)
    if HW > max_tile:
        tile = max_tile                                    # multiple of 128
        hwp = -(-HW // tile) * tile
        if hwp != HW:
            x3 = jnp.pad(x3, ((0, 0), (0, 0), (0, hwp - HW)))
    else:
        tile = HW                                          # full-extent block
        hwp = HW
    n_t = hwp // tile

    w2 = w.reshape(NO, C)
    ia2 = ia.reshape(C, 1)

    # Per-output-channel constant table: [bias, ImplicitM, mx, my, mwh, anchor]
    # Output channel c = a*no + o (anchor-major), matching view(bs,na,no,ny,nx).
    o_idx = np.tile(np.arange(no), na)
    a_idx = np.repeat(np.arange(na), no)
    mx = jnp.asarray((o_idx == 0).astype(np.float32))
    my = jnp.asarray((o_idx == 1).astype(np.float32))
    mwh = jnp.asarray(((o_idx == 2) | (o_idx == 3)).astype(np.float32))
    anc = jnp.where(jnp.asarray(o_idx == 2), anchors_l[a_idx, 0],
                    jnp.where(jnp.asarray(o_idx == 3), anchors_l[a_idx, 1], 0.0))
    cst = jnp.stack([b, im.reshape(NO), mx, my, mwh, anc], axis=1)  # (NO, 6)

    kern = functools.partial(_idetect_level_kernel,
                             float(stride), float(W), tile)
    raw, y = pl.pallas_call(
        kern,
        out_shape=(jax.ShapeDtypeStruct((B, NO, hwp), jnp.float32),
                   jax.ShapeDtypeStruct((B, NO, hwp), jnp.float32)),
        grid=(B, n_t),
        in_specs=[
            pl.BlockSpec((None, C, tile), lambda bb, t: (bb, 0, t)),
            pl.BlockSpec((NO, C), lambda bb, t: (0, 0)),   # fetched once
            pl.BlockSpec((C, 1), lambda bb, t: (0, 0)),    # fetched once
            pl.BlockSpec((NO, 6), lambda bb, t: (0, 0)),   # fetched once
        ],
        out_specs=(pl.BlockSpec((None, NO, tile), lambda bb, t: (bb, 0, t)),
                   pl.BlockSpec((None, NO, tile), lambda bb, t: (bb, 0, t))),
        compiler_params=pltpu.CompilerParams(
            dimension_semantics=("parallel", "parallel")),
    )(x3, w2, ia2, cst)

    if hwp != HW:
        raw = raw[..., :HW]
        y = y[..., :HW]

    # (B, NO, HW) -> PyTorch x[i] (B, na, H, W, no) and z (B, na*H*W, no).
    raw5 = raw.reshape(B, na, no, H, W).transpose(0, 1, 3, 4, 2)
    z = y.reshape(B, na, no, H, W).transpose(0, 1, 3, 4, 2).reshape(B, na * HW, no)
    return raw5, z


def idetect_forward(xs, params, anchors, strides, no, na):
    """Inference-mode IDetect.forward: returns (cat(z, 1), [x_i, ...])."""
    raws, zs = [], []
    for i, x in enumerate(xs):
        w, b, ia, im = params[i]
        raw5, z = idetect_level(x, w, b, ia, im, anchors[i], strides[i], no, na)
        raws.append(raw5)
        zs.append(z)
    return jnp.concatenate(zs, axis=1), raws


# --------------------------------------------------------------------------
# Pure-JAX reference for verification (mirrors PyTorch semantics).
# --------------------------------------------------------------------------
def ref_level(x_nchw, w, b, ia, im, anchors_l, stride, no, na):
    B, C, H, W = x_nchw.shape
    xin = x_nchw + ia.reshape(1, C, 1, 1)
    conv = jnp.einsum('bchw,oc->bohw', xin, w.reshape(na * no, C))
    conv = (conv + b.reshape(1, -1, 1, 1)) * im.reshape(1, -1, 1, 1)
    xr = conv.reshape(B, na, no, H, W).transpose(0, 1, 3, 4, 2)   # (B,na,H,W,no)
    y = jax.nn.sigmoid(xr)
    yy, xx = jnp.meshgrid(jnp.arange(H), jnp.arange(W), indexing='ij')
    grid = jnp.stack((xx, yy), axis=-1).astype(jnp.float32)       # (H,W,2)
    xy = (y[..., 0:2] * 2.0 - 0.5 + grid) * stride
    wh = (y[..., 2:4] * 2.0) ** 2 * anchors_l.reshape(1, na, 1, 1, 2)
    y = jnp.concatenate([xy, wh, y[..., 4:]], axis=-1)
    return xr, y.reshape(B, -1, no)


if __name__ == "__main__":
    nc = 3
    no = nc + 5                       # 8
    na = 3                            # 3 anchors per level
    NO = no * na                      # 24 output channels of each 1x1 conv
    ch = (4, 8, 16)                   # input channels per level
    spatial = (16, 8, 4)              # H = W per level
    strides = (8.0, 16.0, 32.0)
    B = 2

    anchors_np = np.array([[10, 13, 16, 30, 33, 23],
                           [30, 61, 62, 45, 59, 119],
                           [116, 90, 156, 198, 373, 326]],
                          dtype=np.float32).reshape(3, na, 2)
    anchors = jnp.asarray(anchors_np)

    key = jax.random.PRNGKey(0)
    params, xs = [], []
    for i, (c, s) in enumerate(zip(ch, spatial)):
        key, kw, kb, kia, kim, kx = jax.random.split(key, 6)
        w = jax.random.normal(kw, (NO, c, 1, 1), jnp.float32) * 0.1   # Conv2d weight
        b = jax.random.normal(kb, (NO,), jnp.float32) * 0.1           # Conv2d bias
        ia = jax.random.normal(kia, (1, c, 1, 1), jnp.float32) * 0.02  # ImplicitA
        im = 1.0 + jax.random.normal(kim, (1, NO, 1, 1), jnp.float32) * 0.02  # ImplicitM
        params.append((w, b, ia, im))
        xs.append(jax.random.normal(kx, (B, c, s, s), jnp.float32))

    z_cat, raw_list = idetect_forward(xs, params, anchors, strides, no, na)
    z_cat = jax.block_until_ready(z_cat)
    raw_list = [jax.block_until_ready(r) for r in raw_list]

    # Verify against the pure-JAX reference.
    ref_raws, ref_zs = [], []
    for i, x in enumerate(xs):
        w, b, ia, im = params[i]
        rr, rz = ref_level(x, w, b, ia, im, anchors[i], strides[i], no, na)
        ref_raws.append(rr)
        ref_zs.append(rz)
    ref_z_cat = jnp.concatenate(ref_zs, axis=1)

    assert z_cat.shape == (B, na * sum(s * s for s in spatial), no)
    np.testing.assert_allclose(np.asarray(z_cat), np.asarray(ref_z_cat),
                               rtol=1e-4, atol=5e-4)
    for r, rr in zip(raw_list, ref_raws):
        np.testing.assert_allclose(np.asarray(r), np.asarray(rr),
                                   rtol=1e-4, atol=5e-4)

    print("KERNEL_OK")
</pallas_src>

<mosaic_0001>
module attributes {stable_mosaic.version = 11 : i64} {
  func.func @_idetect_level_kernel(%arg0: i32, %arg1: i32, %arg2: memref<1x4x256xf32, #tpu.memory_space<vmem>>, %arg3: memref<24x4xf32, #tpu.memory_space<vmem>>, %arg4: memref<4x1xf32, #tpu.memory_space<vmem>>, %arg5: memref<24x6xf32, #tpu.memory_space<vmem>>, %arg6: memref<1x24x256xf32, #tpu.memory_space<vmem>>, %arg7: memref<1x24x256xf32, #tpu.memory_space<vmem>>) attributes {dimension_semantics = [#tpu.dimension_semantics<parallel>, #tpu.dimension_semantics<parallel>], iteration_bounds = array<i64: 2, 1>, scalar_prefetch = 0 : i64, scratch_operands = 0 : i64, tpu.core_type = #tpu.core_type<tc>, window_params = [{transform_indices = @transform_0, window_bounds = array<i64: 1, 4, 256>}, {pipeline_mode = #tpu.pipeline_mode<synchronous>, transform_indices = @transform_1, window_bounds = array<i64: 24, 4>}, {pipeline_mode = #tpu.pipeline_mode<synchronous>, transform_indices = @transform_2, window_bounds = array<i64: 4, 1>}, {pipeline_mode = #tpu.pipeline_mode<synchronous>, transform_indices = @transform_3, window_bounds = array<i64: 24, 6>}, {transform_indices = @transform_4, window_bounds = array<i64: 1, 24, 256>}, {transform_indices = @transform_5, window_bounds = array<i64: 1, 24, 256>}]} {
    %c0 = arith.constant 0 : index
    %c0_0 = arith.constant 0 : index
    %c0_1 = arith.constant 0 : index
    %0 = vector.load %arg2[%c0, %c0_0, %c0_1] : memref<1x4x256xf32, #tpu.memory_space<vmem>>, vector<1x4x256xf32>
    %1 = vector.shape_cast %0 : vector<1x4x256xf32> to vector<4x256xf32>
    %c0_2 = arith.constant 0 : index
    %c0_3 = arith.constant 0 : index
    %2 = vector.load %arg4[%c0_2, %c0_3] : memref<4x1xf32, #tpu.memory_space<vmem>>, vector<4x1xf32>
    %3 = vector.broadcast %2 : vector<4x1xf32> to vector<4x256xf32>
    %4 = arith.addf %1, %3 : vector<4x256xf32>
    %c0_4 = arith.constant 0 : index
    %c0_5 = arith.constant 0 : index
    %5 = vector.load %arg3[%c0_4, %c0_5] : memref<24x4xf32, #tpu.memory_space<vmem>>, vector<24x4xf32>
    %cst = arith.constant dense<0.000000e+00> : vector<24x256xf32>
    %6 = tpu.matmul %5, %4, %cst {dimension_numbers = #tpu.dot_dimension_numbers<[1], [0], [0], [1], [0, 0, 1, 1], [], []>} : vector<24x4xf32>, vector<4x256xf32>, vector<24x256xf32> -> vector<24x256xf32>
    %c0_6 = arith.constant 0 : index
    %c0_7 = arith.constant 0 : index
    %7 = vector.load %arg5[%c0_6, %c0_7] : memref<24x6xf32, #tpu.memory_space<vmem>>, vector<24x6xf32>
    %8 = vector.extract_strided_slice %7 {offsets = [0, 0], sizes = [24, 1], strides = [1, 1]} : vector<24x6xf32> to vector<24x1xf32>
    %9 = vector.extract_strided_slice %7 {offsets = [0, 1], sizes = [24, 1], strides = [1, 1]} : vector<24x6xf32> to vector<24x1xf32>
    %10 = vector.extract_strided_slice %7 {offsets = [0, 2], sizes = [24, 1], strides = [1, 1]} : vector<24x6xf32> to vector<24x1xf32>
    %11 = vector.extract_strided_slice %7 {offsets = [0, 3], sizes = [24, 1], strides = [1, 1]} : vector<24x6xf32> to vector<24x1xf32>
    %12 = vector.extract_strided_slice %7 {offsets = [0, 4], sizes = [24, 1], strides = [1, 1]} : vector<24x6xf32> to vector<24x1xf32>
    %13 = vector.extract_strided_slice %7 {offsets = [0, 5], sizes = [24, 1], strides = [1, 1]} : vector<24x6xf32> to vector<24x1xf32>
    %14 = vector.broadcast %8 : vector<24x1xf32> to vector<24x256xf32>
    %15 = arith.addf %6, %14 : vector<24x256xf32>
    %16 = vector.broadcast %9 : vector<24x1xf32> to vector<24x256xf32>
    %17 = arith.mulf %15, %16 : vector<24x256xf32>
    %c0_8 = arith.constant 0 : index
    %c0_9 = arith.constant 0 : index
    %c0_10 = arith.constant 0 : index
    %18 = vector.load %arg6[%c0_8, %c0_9, %c0_10] : memref<1x24x256xf32, #tpu.memory_space<vmem>>, vector<1x24x256xf32>
    %19 = vector.shape_cast %18 : vector<1x24x256xf32> to vector<24x256xf32>
    %20 = vector.shape_cast %17 : vector<24x256xf32> to vector<1x24x256xf32>
    tpu.vector_store %arg6[%c0_8, %c0_9, %c0_10], %20 {strides = array<i32>} : memref<1x24x256xf32, #tpu.memory_space<vmem>>, vector<1x24x256xf32>,
    %21 = arith.negf %17 : vector<24x256xf32>
    %22 = math.exp %21 : vector<24x256xf32>
    %cst_11 = arith.constant 1.000000e+00 : f32
    %23 = vector.broadcast %cst_11 : f32 to vector<24x256xf32>
    %24 = arith.addf %23, %22 : vector<24x256xf32>
    %25 = arith.divf %23, %24 : vector<24x256xf32>
    %26 = tpu.iota {dimensions = array<i32: 1>} : vector<1x256xi32>
    %c256_i32 = arith.constant 256 : i32
    %27 = arith.muli %arg1, %c256_i32 : i32
    %28 = vector.broadcast %27 : i32 to vector<1x256xi32>
    %29 = arith.addi %26, %28 : vector<1x256xi32>
    %30 = arith.sitofp %29 : vector<1x256xi32> to vector<1x256xf32>
    %cst_12 = arith.constant 5.000000e-01 : f32
    %31 = vector.broadcast %cst_12 : f32 to vector<1x256xf32>
    %32 = arith.addf %30, %31 : vector<1x256xf32>
    %cst_13 = arith.constant 1.600000e+01 : f32
    %33 = vector.broadcast %cst_13 : f32 to vector<1x256xf32>
    %34 = arith.divf %32, %33 : vector<1x256xf32>
    %35 = math.floor %34 : vector<1x256xf32>
    %cst_14 = arith.constant 1.600000e+01 : f32
    %36 = vector.broadcast %cst_14 : f32 to vector<1x256xf32>
    %37 = arith.mulf %35, %36 : vector<1x256xf32>
    %38 = arith.subf %30, %37 : vector<1x256xf32>
    %39 = vector.broadcast %10 : vector<24x1xf32> to vector<24x256xf32>
    %40 = vector.broadcast %38 : vector<1x256xf32> to vector<24x256xf32>
    %41 = arith.mulf %39, %40 : vector<24x256xf32>
    %42 = vector.broadcast %11 : vector<24x1xf32> to vector<24x256xf32>
    %43 = vector.broadcast %35 : vector<1x256xf32> to vector<24x256xf32>
    %44 = arith.mulf %42, %43 : vector<24x256xf32>
    %45 = arith.addf %41, %44 : vector<24x256xf32>
    %cst_15 = arith.constant 2.000000e+00 : f32
    %46 = vector.broadcast %cst_15 : f32 to vector<24x256xf32>
    %47 = arith.mulf %25, %46 : vector<24x256xf32>
    %cst_16 = arith.constant 5.000000e-01 : f32
    %48 = vector.broadcast %cst_16 : f32 to vector<24x256xf32>
    %49 = arith.subf %47, %48 : vector<24x256xf32>
    %50 = arith.addf %49, %45 : vector<24x256xf32>
    %cst_17 = arith.constant 8.000000e+00 : f32
    %51 = vector.broadcast %cst_17 : f32 to vector<24x256xf32>
    %52 = arith.mulf %50, %51 : vector<24x256xf32>
    %cst_18 = arith.constant 2.000000e+00 : f32
    %53 = vector.broadcast %cst_18 : f32 to vector<24x256xf32>
    %54 = arith.mulf %25, %53 : vector<24x256xf32>
    %55 = arith.mulf %54, %54 : vector<24x256xf32>
    %56 = vector.broadcast %13 : vector<24x1xf32> to vector<24x256xf32>
    %57 = arith.mulf %55, %56 : vector<24x256xf32>
    %58 = arith.addf %10, %11 : vector<24x1xf32>
    %59 = vector.broadcast %58 : vector<24x1xf32> to vector<24x256xf32>
    %60 = arith.mulf %59, %52 : vector<24x256xf32>
    %61 = vector.broadcast %12 : vector<24x1xf32> to vector<24x256xf32>
    %62 = arith.mulf %61, %57 : vector<24x256xf32>
    %63 = arith.addf %60, %62 : vector<24x256xf32>
    %cst_19 = arith.constant 1.000000e+00 : f32
    %64 = vector.broadcast %cst_19 : f32 to vector<24x1xf32>
    %65 = arith.subf %64, %58 : vector<24x1xf32>
    %66 = arith.subf %65, %12 : vector<24x1xf32>
    %67 = vector.broadcast %66 : vector<24x1xf32> to vector<24x256xf32>
    %68 = arith.mulf %67, %25 : vector<24x256xf32>
    %69 = arith.addf %63, %68 : vector<24x256xf32>
    %c0_20 = arith.constant 0 : index
    %c0_21 = arith.constant 0 : index
    %c0_22 = arith.constant 0 : index
    %70 = vector.load %arg7[%c0_20, %c0_21, %c0_22] : memref<1x24x256xf32, #tpu.memory_space<vmem>>, vector<1x24x256xf32>
    %71 = vector.shape_cast %70 : vector<1x24x256xf32> to vector<24x256xf32>
    %72 = vector.shape_cast %69 : vector<24x256xf32> to vector<1x24x256xf32>
    tpu.vector_store %arg7[%c0_20, %c0_21, %c0_22], %72 {strides = array<i32>} : memref<1x24x256xf32, #tpu.memory_space<vmem>>, vector<1x24x256xf32>,
    return
  }
  func.func @transform_0(%arg0: i32, %arg1: i32) -> (i32, i32, i32) {
    %c0_i32 = arith.constant 0 : i32
    %c0_i32_0 = arith.constant 0 : i32
    return %arg0, %c0_i32, %arg1 : i32, i32, i32
  }
  func.func @transform_1(%arg0: i32, %arg1: i32) -> (i32, i32) {
    %c0_i32 = arith.constant 0 : i32
    %c0_i32_0 = arith.constant 0 : i32
    %c0_i32_1 = arith.constant 0 : i32
    return %c0_i32, %c0_i32_0 : i32, i32
  }
  func.func @transform_2(%arg0: i32, %arg1: i32) -> (i32, i32) {
    %c0_i32 = arith.constant 0 : i32
    %c0_i32_0 = arith.constant 0 : i32
    %c0_i32_1 = arith.constant 0 : i32
    return %c0_i32, %c0_i32_0 : i32, i32
  }
  func.func @transform_3(%arg0: i32, %arg1: i32) -> (i32, i32) {
    %c0_i32 = arith.constant 0 : i32
    %c0_i32_0 = arith.constant 0 : i32
    %c0_i32_1 = arith.constant 0 : i32
    return %c0_i32, %c0_i32_0 : i32, i32
  }
  func.func @transform_4(%arg0: i32, %arg1: i32) -> (i32, i32, i32) {
    %c0_i32 = arith.constant 0 : i32
    %c0_i32_0 = arith.constant 0 : i32
    return %arg0, %c0_i32, %arg1 : i32, i32, i32
  }
  func.func @transform_5(%arg0: i32, %arg1: i32) -> (i32, i32, i32) {
    %c0_i32 = arith.constant 0 : i32
    %c0_i32_0 = arith.constant 0 : i32
    return %arg0, %c0_i32, %arg1 : i32, i32, i32
  }
}

</mosaic_0001>

<llo_original>
// kernel: tpu_custom_call.1
$region0: #{tpu_custom_call.1}
  #allocation0 [shape = 'u32[]', space=smem, size = 0x4, offset = 0x4, fixed_abs, tag = 'smem constant byte address 0x4 - core index']
  #allocation1 [shape = 'u32[144,128]{1,0:T(1,128)}', space=vmem, size = 0x12000, scoped, tag = 'internal scratch']
  %s0 = inlined_call_operand.vmem [shape: f32[2,4,256], index: 0, kind: input, shape index: {}]
  %s1 = inlined_call_operand.vmem [shape: f32[24,4], index: 1, kind: input, shape index: {}]
  %s2 = inlined_call_operand.vmem [shape: f32[4,1], index: 2, kind: input, shape index: {}]
  %s3 = inlined_call_operand.vmem [shape: f32[24,6], index: 3, kind: input, shape index: {}]
  %s4 = inlined_call_operand.hbm [shape: f32[2,24,256], index: 4, kind: output, shape index: {0}]
  %s5 = inlined_call_operand.hbm [shape: f32[2,24,256], index: 5, kind: output, shape index: {1}]
  %6 = xla_tuple %s4, %s5
  %s7 = sld [smem:[#allocation0]]
  $region57: #{tpu_custom_call.1} parent=0
    _
  %s9 = ssub.s32 1, %s7
  %s10 = scalar_select 0, %s9, %s7
  $region1: #{tpu_custom_call.1} parent=0
    #allocation2 [shape = 'u8[49152]{0}', space=vmem, size = 0xc000, scoped, tag = 'output window, operand 0']
    #allocation3 [shape = 's32[2]{0}', space=sflag, size = 0x8, scoped, tag = 'scoped memory for tpu_custom_call.1']
    #allocation4 [shape = 'u8[49152]{0}', space=vmem, size = 0xc000, scoped, tag = 'output window, operand 1']
    #allocation5 [shape = 's32[2]{0}', space=sflag, size = 0x8, scoped, tag = 'scoped memory for tpu_custom_call.1']
    %11 = vsyncpa [#allocation3], 0
    %s12 = scalar_lea.sflag [#allocation3], 1
    %13 = vsyncpa %s12, 0
    %14 = vsyncpa [#allocation5], 0
    %s15 = scalar_lea.sflag [#allocation5], 1
    %16 = vsyncpa %s15, 0
    loop: start=0, step=1, limit=4
    $region2: #{tpu_custom_call.1} parent=1 // loop_pre_header
      _
    $region3: #{tpu_custom_call.1} parent=1 // loop_header
      %s18 = sphi 0, %s22
      %p19 = scmp.ge.s32.totalorder %s18, 4
      %s25 = sphi 0, %s37
      %s26 = sphi 0, %s33
      %s27 = sphi 0, %s25
      %s28 = sphi 0, %s26
      %s29 = sphi 0, %s27
      %s30 = sphi 0, %s28
      %s42 = sphi 0, %s44
      %s45 = sphi 0, %s42
      %s46 = sphi 0, %s45
      %s62 = sphi 0, %s46
      %s66 = sphi 0, %s66
      %s68 = sphi 0, %s66
      %s69 = sphi 0, %s68
      %s83 = sphi 0, %s69
      %s87 = sphi 0, %s87
      %s89 = sphi 0, %s87
      %s90 = sphi 0, %s89
      %s104 = sphi 0, %s90
      %s108 = sphi 0, %s108
      %s110 = sphi 0, %s108
      %s111 = sphi 0, %s110
      %s125 = sphi 0, %s111
      %s133 = sphi 0, %s135
      %s136 = sphi 0, %s133
      %s137 = sphi 0, %s136
      %s153 = sphi 0, %s137
      %s161 = sphi 0, %s163
      %s164 = sphi 0, %s161
      %s165 = sphi 0, %s164
      %s181 = sphi 0, %s165
    $region4: #{tpu_custom_call.1} parent=1 // loop_header_branch
      %21 = sbr.rel (%p19) target = $region8
    $region5: #{tpu_custom_call.1} parent=1 // loop_body
      %s23 = ssub.s32 %s18, 1
      %s24 = ssub.s32 %s18, 2
      %s31 = sadd.s32 1, %s26
      %p32 = scmp.ge.s32.totalorder %s31, 1
      %s33 = scalar_select %p32, 0, %s31
      %s34 = sadd.s32 1, %s25
      %s35 = scalar_select %p32, %s34, %s25
      %p36 = scmp.ge.s32.totalorder %s35, 2
      %s37 = scalar_select %p36, 0, %s35
      %s38 = ssub.s32 %s25, %s37
      %s39 = ssub.s32 %s26, %s33
      %s40 = sor.u32 %s38, %s39
      %p41 = scmp.eq.s32.totalorder %s40, 0
      %s43 = sadd.s32 %s42, 1
      %s44 = scalar_select %p41, %s42, %s43
      %p47 = pneg %p41
      %p48 = scmp.eq.s32.totalorder %s18, 1
      %p49 = por %p47, %p48
      %p50 = scmp.ne.s32.totalorder %s42, %s45
      %p51 = scmp.eq.s32.totalorder %s18, 0
      %p52 = por %p50, %p51
      %p53 = scmp.ne.s32.totalorder %s42, %s45
      %p54 = scmp.eq.s32.totalorder %s23, 1
      %p55 = por %p53, %p54
      %p56 = scmp.ne.s32.totalorder %s45, %s46
      %p57 = scmp.eq.s32.totalorder %s23, 0
      %p58 = por %p56, %p57
      %p59 = scmp.ne.s32.totalorder %s45, %s46
      %p60 = scmp.eq.s32.totalorder %s24, 1
      %p61 = por %p59, %p60
      %p63 = scmp.ne.s32.totalorder %s46, %s62
      %p64 = scmp.eq.s32.totalorder %s24, 0
      %p65 = por %p63, %p64
      %s67 = sadd.s32 %s66, 1
      %p70 = scmp.eq.s32.totalorder %s18, 1
      %p71 = scmp.ne.s32.totalorder %s66, %s68
      %p72 = scmp.eq.s32.totalorder %s18, 0
      %p73 = por %p71, %p72
      %p74 = scmp.ne.s32.totalorder %s66, %s68
      %p75 = scmp.eq.s32.totalorder %s23, 1
      %p76 = por %p74, %p75
      %p77 = scmp.ne.s32.totalorder %s68, %s69
      %p78 = scmp.eq.s32.totalorder %s23, 0
      %p79 = por %p77, %p78
      %p80 = scmp.ne.s32.totalorder %s68, %s69
      %p81 = scmp.eq.s32.totalorder %s24, 1
      %p82 = por %p80, %p81
      %p84 = scmp.ne.s32.totalorder %s69, %s83
      %p85 = scmp.eq.s32.totalorder %s24, 0
      %p86 = por %p84, %p85
      %s88 = sadd.s32 %s87, 1
      %p91 = scmp.eq.s32.totalorder %s18, 1
      %p92 = scmp.ne.s32.totalorder %s87, %s89
      %p93 = scmp.eq.s32.totalorder %s18, 0
      %p94 = por %p92, %p93
      %p95 = scmp.ne.s32.totalorder %s87, %s89
      %p96 = scmp.eq.s32.totalorder %s23, 1
      %p97 = por %p95, %p96
      %p98 = scmp.ne.s32.totalorder %s89, %s90
      %p99 = scmp.eq.s32.totalorder %s23, 0
      %p100 = por %p98, %p99
      %p101 = scmp.ne.s32.totalorder %s89, %s90
      %p102 = scmp.eq.s32.totalorder %s24, 1
      %p103 = por %p101, %p102
      %p105 = scmp.ne.s32.totalorder %s90, %s104
      %p106 = scmp.eq.s32.totalorder %s24, 0
      %p107 = por %p105, %p106
      %s109 = sadd.s32 %s108, 1
      %p112 = scmp.eq.s32.totalorder %s18, 1
      %p113 = scmp.ne.s32.totalorder %s108, %s110
      %p114 = scmp.eq.s32.totalorder %s18, 0
      %p115 = por %p113, %p114
      %p116 = scmp.ne.s32.totalorder %s108, %s110
      %p117 = scmp.eq.s32.totalorder %s23, 1
      %p118 = por %p116, %p117
      %p119 = scmp.ne.s32.totalorder %s110, %s111
      %p120 = scmp.eq.s32.totalorder %s23, 0
      %p121 = por %p119, %p120
      %p122 = scmp.ne.s32.totalorder %s110, %s111
      %p123 = scmp.eq.s32.totalorder %s24, 1
      %p124 = por %p122, %p123
      %p126 = scmp.ne.s32.totalorder %s111, %s125
      %p127 = scmp.eq.s32.totalorder %s24, 0
      %p128 = por %p126, %p127
      %s129 = ssub.s32 %s25, %s37
      %s130 = ssub.s32 %s26, %s33
      %s131 = sor.u32 %s129, %s130
      %p132 = scmp.eq.s32.totalorder %s131, 0
      %s134 = sadd.s32 %s133, 1
      %s135 = scalar_select %p132, %s133, %s134
      %p138 = pneg %p132
      %p139 = scmp.eq.s32.totalorder %s18, 1
      %p140 = por %p138, %p139
      %p141 = scmp.ne.s32.totalorder %s133, %s136
      %p142 = scmp.eq.s32.totalorder %s18, 0
      %p143 = por %p141, %p142
      %p144 = scmp.ne.s32.totalorder %s133, %s136
      %p145 = scmp.eq.s32.totalorder %s23, 1
      %p146 = por %p144, %p145
      %p147 = scmp.ne.s32.totalorder %s136, %s137
      %p148 = scmp.eq.s32.totalorder %s23, 0
      %p149 = por %p147, %p148
      %p150 = scmp.ne.s32.totalorder %s136, %s137
      %p151 = scmp.eq.s32.totalorder %s24, 1
      %p152 = por %p150, %p151
      %p154 = scmp.ne.s32.totalorder %s137, %s153
      %p155 = scmp.eq.s32.totalorder %s24, 0
      %p156 = por %p154, %p155
      %s157 = ssub.s32 %s25, %s37
      %s158 = ssub.s32 %s26, %s33
      %s159 = sor.u32 %s157, %s158
      %p160 = scmp.eq.s32.totalorder %s159, 0
      %s162 = sadd.s32 %s161, 1
      %s163 = scalar_select %p160, %s161, %s162
      %p166 = pneg %p160
      %p167 = scmp.eq.s32.totalorder %s18, 1
      %p168 = por %p166, %p167
      %p169 = scmp.ne.s32.totalorder %s161, %s164
      %p170 = scmp.eq.s32.totalorder %s18, 0
      %p171 = por %p169, %p170
      %p172 = scmp.ne.s32.totalorder %s161, %s164
      %p173 = scmp.eq.s32.totalorder %s23, 1
      %p174 = por %p172, %p173
      %p175 = scmp.ne.s32.totalorder %s164, %s165
      %p176 = scmp.eq.s32.totalorder %s23, 0
      %p177 = por %p175, %p176
      %p178 = scmp.ne.s32.totalorder %s164, %s165
      %p179 = scmp.eq.s32.totalorder %s24, 1
      %p180 = por %p178, %p179
      %p182 = scmp.ne.s32.totalorder %s165, %s181
      %p183 = scmp.eq.s32.totalorder %s24, 0
      %p184 = por %p182, %p183
      %p185 = scmp.le.s32.totalorder 1, %s18
      %p186 = scmp.lt.s32.totalorder %s18, 3
      %p187 = pnand %p185, %p186
      %p188 = pneg %p187
      // Predicated region
      $region9: #{tpu_custom_call.1} parent=5 // pred_check
        _
      $region10: #{tpu_custom_call.1} parent=5 // pred_check_branch
        %190 = sbr.rel (%p187) target = $region12
      $region11: #{tpu_custom_call.1} parent=5 // pred_region
        %s191 = ssub.s32 %s18, 1
        // Predicated region
        $region13: #{tpu_custom_call.1} parent=11 // pred_check
          %p192 = pneg %p79
        $region14: #{tpu_custom_call.1} parent=11 // pred_check_branch
          %194 = sbr.rel (%p192) target = $region16
        $region15: #{tpu_custom_call.1} parent=11 // pred_region
          _
        $region16: #{tpu_custom_call.1} parent=11 // pred_fallthru
          _
        // Predicated region
        $region17: #{tpu_custom_call.1} parent=11 // pred_check
          %p195 = pneg %p100
        $region18: #{tpu_custom_call.1} parent=11 // pred_check_branch
          %197 = sbr.rel (%p195) target = $region20
        $region19: #{tpu_custom_call.1} parent=11 // pred_region
          _
        $region20: #{tpu_custom_call.1} parent=11 // pred_fallthru
          _
        // Predicated region
        $region21: #{tpu_custom_call.1} parent=11 // pred_check
          %p198 = pneg %p121
        $region22: #{tpu_custom_call.1} parent=11 // pred_check_branch
          %200 = sbr.rel (%p198) target = $region24
        $region23: #{tpu_custom_call.1} parent=11 // pred_region
          _
        $region24: #{tpu_custom_call.1} parent=11 // pred_fallthru
          _
      $region12: #{tpu_custom_call.1} parent=5 // pred_fallthru
        _
      %p201 = scmp.lt.s32.totalorder %s18, 2
      // Predicated region
      $region25: #{tpu_custom_call.1} parent=5 // pred_check
        %p202 = pneg %p201
      $region26: #{tpu_custom_call.1} parent=5 // pred_check_branch
        %204 = sbr.rel (%p202) target = $region28
      $region27: #{tpu_custom_call.1} parent=5 // pred_region
        // Predicated region
        $region29: #{tpu_custom_call.1} parent=27 // pred_check
          %p205 = pneg %p52
        $region30: #{tpu_custom_call.1} parent=27 // pred_check_branch
          %207 = sbr.rel (%p205) target = $region32
        $region31: #{tpu_custom_call.1} parent=27 // pred_region
          %s208 = smul.u32 2, %s26
          %p209 = scmp.lt.s32.totalorder %s25, 1
          %s210 = scalar_select %p209, %s25, 1
          %p211 = scmp.lt.s32.totalorder %s208, 1
          %s212 = scalar_select %p211, %s208, 1
          %s213 = smul.addr %s210, 2
          %s214 = sadd.s32 %s212, %s213
          %s215 = smul.addr %s214, 4
          %s216 = scalar_lea.vmem %s0, %s215
          %s217 = smul.u32 2, %s26
        $region32: #{tpu_custom_call.1} parent=27 // pred_fallthru
          _
      $region28: #{tpu_custom_call.1} parent=5 // pred_fallthru
        _
      %p218 = scmp.le.s32.totalorder 1, %s18
      %p219 = scmp.lt.s32.totalorder %s18, 3
      %p220 = pnand %p218, %p219
      %p221 = pneg %p220
      // Predicated region
      $region33: #{tpu_custom_call.1} parent=5 // pred_check
        _
      $region34: #{tpu_custom_call.1} parent=5 // pred_check_branch
        %223 = sbr.rel (%p220) target = $region36
      $region35: #{tpu_custom_call.1} parent=5 // pred_region
        %s224 = ssub.s32 %s18, 1
        %s225 = smul.u32 2, %s28
        %p226 = scmp.lt.s32.totalorder %s27, 1
        %s227 = scalar_select %p226, %s27, 1
        %p228 = scmp.lt.s32.totalorder %s225, 1
        %s229 = scalar_select %p228, %s225, 1
        %s230 = smul.addr %s227, 2
        %s231 = sadd.s32 %s229, %s230
        %s232 = smul.addr %s231, 4
        %s233 = scalar_lea.vmem %s0, %s232
        %p234 = pneg %p58
        %p235 = pneg %p55
        %p236 = pneg %p79
        %p237 = pneg %p76
        %p238 = pneg %p100
        %p239 = pneg %p97
        %p240 = pneg %p121
        %p241 = pneg %p118
        %p242 = pneg %p149
        %p243 = pneg %p146
        %s244 = sand.u32 %s136, 1
        %s245 = scalar_lea.sflag [#allocation3], %s244
        %s246 = sand.u32 %s136, 1
        %s247 = smul.addr %s246, 48
        %s248 = scalar_lea.vmem [#allocation2], %s247
        %p249 = pneg %p177
        %p250 = pneg %p174
        %s251 = sand.u32 %s164, 1
        %s252 = scalar_lea.sflag [#allocation5], %s251
        %s253 = sand.u32 %s164, 1
        %s254 = smul.addr %s253, 48
        %s255 = scalar_lea.vmem [#allocation4], %s254
        %s256 = smul.u32 2, %s28
        %p257 = scmp.lt.s32.totalorder %s27, 1
        %s258 = scalar_select %p257, %s27, 1
        %p259 = scmp.lt.s32.totalorder %s256, 1
        %s260 = scalar_select %p259, %s256, 1
        %s261 = smul.addr %s258, 2
        %s262 = sadd.s32 %s260, %s261
        %s263 = smul.addr %s262, 4
        %s264 = scalar_lea.vmem %s0, %s263
        %s265 = smul.u32 2, %s28
        %s266 = smul.u32 2, %s28
        %s267 = smul.u32 2, %s28
        %v268 = vld [vmem:[%s264] sm:$0xff]
        %v269 = vld [vmem:[%s2] sm:$0xf]
        %271 = vset.pattern.permute.xlu0 0
        %272 = vperm.xlu0 %271, %v269
        %v273 = vpop.permute.xlu0 %272
        %v275 = vunpack.c.l.s4 839922192
        %v276 = vunpack.c.0.s8 %v275
        %v277 = vlaneseq
        %v278 = vshrl.u32 %v277, 7
        %v279 = vsub.s32 %v276, %v278
        %v280 = vrot.slane %v273, %v279
        %v282 = vadd.f32 %v268, %v280
        %v283 = vld [vmem:[%s1] sm:$0xff]
        %v284 = vld [vmem:[%s1 + $0x8] sm:$0xff]
        %v285 = vld [vmem:[%s1 + $0x10] sm:$0xff]
        %v286 = vld [vmem:[%s3] sm:$0xff]
        %v287 = vld [vmem:[%s3 + $0x8] sm:$0xff]
        %v288 = vld [vmem:[%s3 + $0x10] sm:$0xff]
        %290 = vset.pattern.permute.xlu0 0
        %291 = vperm.xlu0 %290, %v286
        %v292 = vpop.permute.xlu0 %291
        %295 = vset.pattern.permute.xlu0 0
        %296 = vperm.xlu0 %295, %v287
        %v297 = vpop.permute.xlu0 %296
        %300 = vset.pattern.permute.xlu0 0
        %301 = vperm.xlu0 %300, %v288
        %v302 = vpop.permute.xlu0 %301
        %v305 = vcombine.high %v282, %v282
        %vm306 = vcmask 31744
        %v308 = vsel %vm306, %v283, 0
        %v311 = vsel %vm306, %v284, 0
        %v314 = vsel %vm306, %v285, 0
        %vm316 = vcmask 1043456
        %v317 = vsel %vm316, %v282, 0
        %v319 = vsel %vm316, %v305, 0
        %321 = vmatprep.subr.mxu0 %v319
        %322 = vmatpush1.msra.mxu0 %v317
        %323 = vmatprep.subr.mxu0 0.0
        %324 = vmatpush1.msra.mxu0 0.0
        %325 = vmatprep.subr.mxu0 0.0
        %326 = vmatpush1.msra.mxu0 0.0
        %327 = vmatprep.subr.mxu0 0.0
        %328 = vmatpush1.msra.mxu0 0.0
        %329 = vmatprep.subr.mxu0 0.0
        %330 = vmatpush1.msra.mxu0 0.0
        %331 = vmatprep.subr.mxu0 0.0
        %332 = vmatpush1.msra.mxu0 0.0
        %333 = vmatprep.subr.mxu0 0.0
        %334 = vmatpush1.msra.mxu0 0.0
        %335 = vmatprep.subr.mxu0 0.0
        %336 = vmatpush1.msra.mxu0 0.0
        %337 = vmatprep.subr.mxu0 0.0
        %338 = vmatpush1.msra.mxu0 0.0
        %339 = vmatprep.subr.mxu0 0.0
        %340 = vmatpush1.msra.mxu0 0.0
        %341 = vmatprep.subr.mxu0 0.0
        %342 = vmatpush1.msra.mxu0 0.0
        %343 = vmatprep.subr.mxu0 0.0
        %344 = vmatpush1.msra.mxu0 0.0
        %345 = vmatprep.subr.mxu0 0.0
        %346 = vmatpush1.msra.mxu0 0.0
        %347 = vmatprep.subr.mxu0 0.0
        %348 = vmatpush1.msra.mxu0 0.0
        %349 = vmatprep.subr.mxu0 0.0
        %350 = vmatpush1.msra.mxu0 0.0
        %351 = vmatprep.subr.mxu0 0.0
        %352 = vmatpush1.msra.mxu0 0.0
        %353 = vmatprep.subr.mxu0 0.0
        %354 = vmatpush1.msra.mxu0 0.0
        %355 = vmatprep.subr.mxu0 0.0
        %356 = vmatpush1.msra.mxu0 0.0
        %357 = vmatprep.subr.mxu0 0.0
        %358 = vmatpush1.msra.mxu0 0.0
        %359 = vmatprep.subr.mxu0 0.0
        %360 = vmatpush1.msra.mxu0 0.0
        %361 = vmatprep.subr.mxu0 0.0
        %362 = vmatpush1.msra.mxu0 0.0
        %363 = vmatprep.subr.mxu0 0.0
        %364 = vmatpush1.msra.mxu0 0.0
        %365 = vmatprep.subr.mxu0 0.0
        %366 = vmatpush1.msra.mxu0 0.0
        %367 = vmatprep.subr.mxu0 0.0
        %368 = vmatpush1.msra.mxu0 0.0
        %369 = vmatprep.subr.mxu0 0.0
        %370 = vmatpush1.msra.mxu0 0.0
        %371 = vmatprep.subr.mxu0 0.0
        %372 = vmatpush1.msra.mxu0 0.0
        %373 = vmatprep.subr.mxu0 0.0
        %374 = vmatpush1.msra.mxu0 0.0
        %375 = vmatprep.subr.mxu0 0.0
        %376 = vmatpush1.msra.mxu0 0.0
        %377 = vmatprep.subr.mxu0 0.0
        %378 = vmatpush1.msra.mxu0 0.0
        %379 = vmatprep.subr.mxu0 0.0
        %380 = vmatpush1.msra.mxu0 0.0
        %381 = vmatprep.subr.mxu0 0.0
        %382 = vmatpush1.msra.mxu0 0.0
        %383 = vmatprep.subr.mxu0 0.0
        %384 = vmatpush1.msra.mxu0 0.0
        %385 = vmatprep.mubr.f32.mxu0 0.0
        %386 = vmatmul.mubr.f32.gmra.mrb[0].mxu0 %v308
        %v387 = vpop.f32.mrb[0].mxu0
        %v388 = vadd.f32 %v292, %v387
        %v389 = vpop.f32.mrb[0].mxu0
        %v390 = vadd.f32 %v292, %v389
        %391 = vmatprep.mubr.f32.mxu0 0.0
        %392 = vmatmul.mubr.f32.gmra.mrb[0].mxu0 %v311
        %v393 = vpop.f32.mrb[0].mxu0
        %v394 = vadd.f32 %v297, %v393
        %v395 = vpop.f32.mrb[0].mxu0
        %v396 = vadd.f32 %v297, %v395
        %397 = vmatprep.mubr.f32.mxu0 0.0
        %398 = vmatmul.mubr.f32.gmra.mrb[0].mxu0 %v314
        %v399 = vpop.f32.mrb[0].mxu0
        %v400 = vadd.f32 %v302, %v399
        %v401 = vpop.f32.mrb[0].mxu0
        %v402 = vadd.f32 %v302, %v401
        %403 = vdwg.mxu0
        %404 = vset.pattern.permute.xlu0 1
        %405 = vperm.xlu0 %404, %v286
        %v406 = vpop.permute.xlu0 %405
        %408 = vset.pattern.permute.xlu0 1
        %409 = vperm.xlu0 %408, %v287
        %v410 = vpop.permute.xlu0 %409
        %412 = vset.pattern.permute.xlu0 1
        %413 = vperm.xlu0 %412, %v288
        %v414 = vpop.permute.xlu0 %413
        %v416 = vmul.f32 %v388, %v406
        %v417 = vmul.f32 %v390, %v406
        %v418 = vmul.f32 %v394, %v410
        %v419 = vmul.f32 %v396, %v410
        %v420 = vmul.f32 %v400, %v414
        %v421 = vmul.f32 %v402, %v414
        %422 = vst [vmem:[%s248] sm:$0xff] %v416
        %423 = vst [vmem:[%s248 + $0x8] sm:$0xff] %v417
        %424 = vst [vmem:[%s248 + $0x10] sm:$0xff] %v418
        %425 = vst [vmem:[%s248 + $0x18] sm:$0xff] %v419
        %426 = vst [vmem:[%s248 + $0x20] sm:$0xff] %v420
        %427 = vst [vmem:[%s248 + $0x28] sm:$0xff] %v421
        %v428 = vxor.u32 %v416, 2147483648
        %v429 = vxor.u32 %v417, 2147483648
        %v430 = vxor.u32 %v418, 2147483648
        %v431 = vxor.u32 %v419, 2147483648
        %v432 = vxor.u32 %v420, 2147483648
        %v433 = vxor.u32 %v421, 2147483648
        %v434 = vmul.f32 %v428, 1.442695
        %v435 = vpow.pop %v434
        %v436 = vmul.f32 %v429, 1.442695
        %v437 = vpow.pop %v436
        %v438 = vmul.f32 %v430, 1.442695
        %v439 = vpow.pop %v438
        %v440 = vmul.f32 %v431, 1.442695
        %v441 = vpow.pop %v440
        %v442 = vmul.f32 %v432, 1.442695
        %v443 = vpow.pop %v442
        %v444 = vmul.f32 %v433, 1.442695
        %v445 = vpow.pop %v444
        %v446 = vadd.f32 %v435, 1.0
        %v447 = vadd.f32 %v437, 1.0
        %v448 = vadd.f32 %v439, 1.0
        %v449 = vadd.f32 %v441, 1.0
        %v450 = vadd.f32 %v443, 1.0
        %v451 = vadd.f32 %v445, 1.0
        %v452 = vrcp.pop %v446
        %v453 = vmul.f32 1.0, %v452
        %v454 = vrcp.pop %v447
        %v455 = vmul.f32 1.0, %v454
        %v456 = vrcp.pop %v448
        %v457 = vmul.f32 1.0, %v456
        %v458 = vrcp.pop %v449
        %v459 = vmul.f32 1.0, %v458
        %v460 = vrcp.pop %v450
        %v461 = vmul.f32 1.0, %v460
        %v462 = vrcp.pop %v451
        %v463 = vmul.f32 1.0, %v462
        %v464 = vlaneseq
        %v465 = vand.u32 %v464, 127
        %v466 = vadd.s32 %v465, 128
        %s467 = smul.u32 %s28, 256
        %v468 = vstv %s467
        %v469 = vadd.s32 %v465, %v468
        %v470 = vadd.s32 %v466, %v468
        %v471 = vcvt.s32.f32 %v469
        %v472 = vcvt.s32.f32 %v470
        %v473 = vadd.f32 %v471, 0.5
        %v474 = vadd.f32 %v472, 0.5
        %v475 = vrcp.pop 16.0
        %v476 = vmul.f32 %v473, %v475
        %v477 = vmul.f32 %v474, %v475
        %v478 = vfloor.f32 %v476
        %v479 = vfloor.f32 %v477
        %v480 = vmul.f32 %v478, 16.0
        %v481 = vmul.f32 %v479, 16.0
        %v482 = vsub.f32 %v471, %v480
        %v483 = vsub.f32 %v472, %v481
        %484 = vset.pattern.permute.xlu0 2
        %485 = vperm.xlu0 %484, %v286
        %v486 = vpop.permute.xlu0 %485
        %488 = vset.pattern.permute.xlu0 2
        %489 = vperm.xlu0 %488, %v287
        %v490 = vpop.permute.xlu0 %489
        %492 = vset.pattern.permute.xlu0 2
        %493 = vperm.xlu0 %492, %v288
        %v494 = vpop.permute.xlu0 %493
        %v496 = vmul.f32 %v486, %v482
        %v497 = vmul.f32 %v486, %v483
        %v498 = vmul.f32 %v490, %v482
        %v499 = vmul.f32 %v490, %v483
        %v500 = vmul.f32 %v494, %v482
        %v501 = vmul.f32 %v494, %v483
        %502 = vset.pattern.permute.xlu0 3
        %503 = vperm.xlu0 %502, %v286
        %v504 = vpop.permute.xlu0 %503
        %506 = vset.pattern.permute.xlu0 3
        %507 = vperm.xlu0 %506, %v287
        %v508 = vpop.permute.xlu0 %507
        %510 = vset.pattern.permute.xlu0 3
        %511 = vperm.xlu0 %510, %v288
        %v512 = vpop.permute.xlu0 %511
        %v514 = vmul.f32 %v504, %v478
        %v515 = vmul.f32 %v504, %v479
        %v516 = vmul.f32 %v508, %v478
        %v517 = vmul.f32 %v508, %v479
        %v518 = vmul.f32 %v512, %v478
        %v519 = vmul.f32 %v512, %v479
        %v520 = vadd.f32 %v496, %v514
        %v521 = vadd.f32 %v497, %v515
        %v522 = vadd.f32 %v498, %v516
        %v523 = vadd.f32 %v499, %v517
        %v524 = vadd.f32 %v500, %v518
        %v525 = vadd.f32 %v501, %v519
        %v526 = vmul.f32 %v453, 2.0
        %v527 = vmul.f32 %v455, 2.0
        %v528 = vmul.f32 %v457, 2.0
        %v529 = vmul.f32 %v459, 2.0
        %v530 = vmul.f32 %v461, 2.0
        %v531 = vmul.f32 %v463, 2.0
        %v532 = vsub.f32 %v526, 0.5
        %v533 = vsub.f32 %v527, 0.5
        %v534 = vsub.f32 %v528, 0.5
        %v535 = vsub.f32 %v529, 0.5
        %v536 = vsub.f32 %v530, 0.5
        %v537 = vsub.f32 %v531, 0.5
        %v538 = vadd.f32 %v532, %v520
        %v539 = vadd.f32 %v533, %v521
        %v540 = vadd.f32 %v534, %v522
        %v541 = vadd.f32 %v535, %v523
        %v542 = vadd.f32 %v536, %v524
        %v543 = vadd.f32 %v537, %v525
        %v544 = vmul.f32 %v538, 8.0
        %v545 = vmul.f32 %v539, 8.0
        %v546 = vmul.f32 %v540, 8.0
        %v547 = vmul.f32 %v541, 8.0
        %v548 = vmul.f32 %v542, 8.0
        %v549 = vmul.f32 %v543, 8.0
        %v550 = vmul.f32 %v526, %v526
        %v551 = vmul.f32 %v527, %v527
        %v552 = vmul.f32 %v528, %v528
        %v553 = vmul.f32 %v529, %v529
        %v554 = vmul.f32 %v530, %v530
        %v555 = vmul.f32 %v531, %v531
        %556 = vset.pattern.permute.xlu0 5
        %557 = vperm.xlu0 %556, %v286
        %v558 = vpop.permute.xlu0 %557
        %560 = vset.pattern.permute.xlu0 5
        %561 = vperm.xlu0 %560, %v287
        %v562 = vpop.permute.xlu0 %561
        %564 = vset.pattern.permute.xlu0 5
        %565 = vperm.xlu0 %564, %v288
        %v566 = vpop.permute.xlu0 %565
        %v568 = vmul.f32 %v550, %v558
        %v569 = vmul.f32 %v551, %v558
        %v570 = vmul.f32 %v552, %v562
        %v571 = vmul.f32 %v553, %v562
        %v572 = vmul.f32 %v554, %v566
        %v573 = vmul.f32 %v555, %v566
        %574 = vrot.lane.b32.xlu0 %v286, 127
        %v575 = vpop.permute.xlu0 %574
        %576 = vrot.lane.b32.xlu0 %v287, 127
        %v577 = vpop.permute.xlu0 %576
        %578 = vrot.lane.b32.xlu0 %v288, 127
        %v579 = vpop.permute.xlu0 %578
        %v583 = vadd.f32 %v286, %v575
        %v584 = vadd.f32 %v287, %v577
        %v585 = vadd.f32 %v288, %v579
        %587 = vset.pattern.permute.xlu0 2
        %588 = vperm.xlu0 %587, %v583
        %v589 = vpop.permute.xlu0 %588
        %592 = vset.pattern.permute.xlu0 2
        %593 = vperm.xlu0 %592, %v584
        %v594 = vpop.permute.xlu0 %593
        %597 = vset.pattern.permute.xlu0 2
        %598 = vperm.xlu0 %597, %v585
        %v599 = vpop.permute.xlu0 %598
        %v601 = vmul.f32 %v589, %v544
        %v602 = vmul.f32 %v589, %v545
        %v603 = vmul.f32 %v594, %v546
        %v604 = vmul.f32 %v594, %v547
        %v605 = vmul.f32 %v599, %v548
        %v606 = vmul.f32 %v599, %v549
        %607 = vset.pattern.permute.xlu0 4
        %608 = vperm.xlu0 %607, %v286
        %v609 = vpop.permute.xlu0 %608
        %611 = vset.pattern.permute.xlu0 4
        %612 = vperm.xlu0 %611, %v287
        %v613 = vpop.permute.xlu0 %612
        %615 = vset.pattern.permute.xlu0 4
        %616 = vperm.xlu0 %615, %v288
        %v617 = vpop.permute.xlu0 %616
        %v619 = vmul.f32 %v609, %v568
        %v620 = vmul.f32 %v609, %v569
        %v621 = vmul.f32 %v613, %v570
        %v622 = vmul.f32 %v613, %v571
        %v623 = vmul.f32 %v617, %v572
        %v624 = vmul.f32 %v617, %v573
        %v625 = vadd.f32 %v601, %v619
        %v626 = vadd.f32 %v602, %v620
        %v627 = vadd.f32 %v603, %v621
        %v628 = vadd.f32 %v604, %v622
        %v629 = vadd.f32 %v605, %v623
        %v630 = vadd.f32 %v606, %v624
        %v631 = vsub.f32 1.0, %v583
        %v632 = vsub.f32 1.0, %v584
        %v633 = vsub.f32 1.0, %v585
        %634 = vrot.lane.b32.xlu0 %v286, 126
        %v635 = vpop.permute.xlu0 %634
        %636 = vrot.lane.b32.xlu0 %v287, 126
        %v637 = vpop.permute.xlu0 %636
        %638 = vrot.lane.b32.xlu0 %v288, 126
        %v639 = vpop.permute.xlu0 %638
        %v643 = vsub.f32 %v631, %v635
        %v644 = vsub.f32 %v632, %v637
        %v645 = vsub.f32 %v633, %v639
        %647 = vset.pattern.permute.xlu0 2
        %648 = vperm.xlu0 %647, %v643
        %v649 = vpop.permute.xlu0 %648
        %652 = vset.pattern.permute.xlu0 2
        %653 = vperm.xlu0 %652, %v644
        %v654 = vpop.permute.xlu0 %653
        %657 = vset.pattern.permute.xlu0 2
        %658 = vperm.xlu0 %657, %v645
        %v659 = vpop.permute.xlu0 %658
        %v661 = vmul.f32 %v649, %v453
        %v662 = vmul.f32 %v649, %v455
        %v663 = vmul.f32 %v654, %v457
        %v664 = vmul.f32 %v654, %v459
        %v665 = vmul.f32 %v659, %v461
        %v666 = vmul.f32 %v659, %v463
        %v667 = vadd.f32 %v625, %v661
        %v668 = vadd.f32 %v626, %v662
        %v669 = vadd.f32 %v627, %v663
        %v670 = vadd.f32 %v628, %v664
        %v671 = vadd.f32 %v629, %v665
        %v672 = vadd.f32 %v630, %v666
        %673 = vst [vmem:[%s255] sm:$0xff] %v667
        %674 = vst [vmem:[%s255 + $0x8] sm:$0xff] %v668
        %675 = vst [vmem:[%s255 + $0x10] sm:$0xff] %v669
        %676 = vst [vmem:[%s255 + $0x18] sm:$0xff] %v670
        %677 = vst [vmem:[%s255 + $0x20] sm:$0xff] %v671
        %678 = vst [vmem:[%s255 + $0x28] sm:$0xff] %v672
        %s679 = sand.u32 %s136, 1
        %s680 = scalar_lea.sflag [#allocation3], %s679
        %s681 = sand.u32 %s136, 1
        %s682 = smul.addr %s681, 48
        %s683 = scalar_lea.vmem [#allocation2], %s682
        %s684 = sand.u32 %s164, 1
        %s685 = scalar_lea.sflag [#allocation5], %s684
        %s686 = sand.u32 %s164, 1
        %s687 = smul.addr %s686, 48
        %s688 = scalar_lea.vmem [#allocation4], %s687
        // Predicated region
        $region37: #{tpu_custom_call.1} parent=35 // pred_check
          %p689 = pneg %p146
        $region38: #{tpu_custom_call.1} parent=35 // pred_check_branch
          %691 = sbr.rel (%p689) target = $region40
        $region39: #{tpu_custom_call.1} parent=35 // pred_region
          %s692 = smul.u32 2, %s28
          %s694 = ssub.s32 768, 768
          %695 = vsyncadd %s680, %s694
          %s696 = smul.addr %s27, 6
          %s697 = sadd.s32 %s692, %s696
          %s698 = smul.addr %s697, 128
          %s699 = scalar_lea.hbm %s4, %s698
          %s700 = sshll.u32 %s683, 4
          %s701 = int_to_ptr.vmem [resolvable:$true] %s700
          %706 = dma.vmem_to_hbm [thread:$0]  %s701, 768, %s699, %s680, 256, 256, 16
        $region40: #{tpu_custom_call.1} parent=35 // pred_fallthru
          _
        // Predicated region
        $region41: #{tpu_custom_call.1} parent=35 // pred_check
          %p707 = pneg %p174
        $region42: #{tpu_custom_call.1} parent=35 // pred_check_branch
          %709 = sbr.rel (%p707) target = $region44
        $region43: #{tpu_custom_call.1} parent=35 // pred_region
          %s710 = smul.u32 2, %s28
          %s712 = ssub.s32 768, 768
          %713 = vsyncadd %s685, %s712
          %s714 = smul.addr %s27, 6
          %s715 = sadd.s32 %s710, %s714
          %s716 = smul.addr %s715, 128
          %s717 = scalar_lea.hbm %s5, %s716
          %s718 = sshll.u32 %s688, 4
          %s719 = int_to_ptr.vmem [resolvable:$true] %s718
          %724 = dma.vmem_to_hbm [thread:$0]  %s719, 768, %s717, %s685, 256, 256, 16
        $region44: #{tpu_custom_call.1} parent=35 // pred_fallthru
          _
      $region36: #{tpu_custom_call.1} parent=5 // pred_fallthru
        _
      %p725 = scmp.le.s32.totalorder 2, %s18
      // Predicated region
      $region45: #{tpu_custom_call.1} parent=5 // pred_check
        %p726 = pneg %p725
      $region46: #{tpu_custom_call.1} parent=5 // pred_check_branch
        %728 = sbr.rel (%p726) target = $region48
      $region47: #{tpu_custom_call.1} parent=5 // pred_region
        %s729 = ssub.s32 %s18, 2
        // Predicated region
        $region49: #{tpu_custom_call.1} parent=47 // pred_check
          %p730 = pneg %p152
        $region50: #{tpu_custom_call.1} parent=47 // pred_check_branch
          %732 = sbr.rel (%p730) target = $region52
        $region51: #{tpu_custom_call.1} parent=47 // pred_region
          %s733 = sand.u32 %s137, 1
          %s734 = scalar_lea.sflag [#allocation3], %s733
          %s735 = sand.u32 %s137, 1
          %s736 = smul.addr %s735, 48
          %s737 = scalar_lea.vmem [#allocation2], %s736
          %738 = dma.done %s734, 768
        $region52: #{tpu_custom_call.1} parent=47 // pred_fallthru
          _
        // Predicated region
        $region53: #{tpu_custom_call.1} parent=47 // pred_check
          %p739 = pneg %p180
        $region54: #{tpu_custom_call.1} parent=47 // pred_check_branch
          %741 = sbr.rel (%p739) target = $region56
        $region55: #{tpu_custom_call.1} parent=47 // pred_region
          %s742 = sand.u32 %s165, 1
          %s743 = scalar_lea.sflag [#allocation5], %s742
          %s744 = sand.u32 %s165, 1
          %s745 = smul.addr %s744, 48
          %s746 = scalar_lea.vmem [#allocation4], %s745
          %747 = dma.done %s743, 768
        $region56: #{tpu_custom_call.1} parent=47 // pred_fallthru
          _
      $region48: #{tpu_custom_call.1} parent=5 // pred_fallthru
        _
    $region6: #{tpu_custom_call.1} parent=1 // loop_footer
      %s22 = sadd.s32 1, %s18
    $region7: #{tpu_custom_call.1} parent=1 // loop_footer_branch
      %17 = sbr.rel target = $region3
    $region8: #{tpu_custom_call.1} parent=1 // loop_exit
      _
    %748 = vsyncpa [#allocation3], 1
    %s749 = scalar_lea.sflag [#allocation3], 1
    %750 = vsyncpa %s749, 1
    %751 = vsyncpa [#allocation5], 1
    %s752 = scalar_lea.sflag [#allocation5], 1
    %753 = vsyncpa %s752, 1

</llo_original>
